<compile_context>
chip_gen: v7x
topology: tpu7x:2x2x1
jax: 0.10.0
libtpu: 0.0.40
codegen_flags: <defaults>
</compile_context>

<pallas_src>
from functools import partial

import jax
import jax.numpy as jnp
from jax import lax
from jax.experimental import pallas as pl
from jax.experimental.pallas import tpu as pltpu

LANE = 128


def _round_up(x, m):
    return -(-x // m) * m


def _pick_tile(total, cap):
    """Largest multiple of 128 that divides `total` and is <= cap (else total)."""
    c = (min(total, cap) // LANE) * LANE
    while c >= LANE:
        if total % c == 0:
            return c
        c -= LANE
    return total


def _vmem_bytes(TB, D, Hp, TN, KC):
    """Rough VMEM footprint of one grid step (worst-case 2 buffers for W2/out)."""
    bf, f32 = 2, 4
    return (2 * TB * D * bf                      # streamed z tile (double buffer)
            + D * Hp * bf + Hp * f32             # resident W1 + b1
            + 2 * Hp * TN * bf + 2 * TN * f32    # W2 / b2 tile
            + 2 * TB * TN * f32                  # output tile (double buffer)
            + TB * KC * f32 + TB * KC * bf       # hidden chunk (f32 + bf16 copy)
            + TB * TN * f32)                     # f32 accumulator


def made_kernel(z_ref, w1_ref, b1_ref, w2_ref, b2_ref, o_ref, *, k_chunk, nk):
    """Fused masked-MLP conditioner tile:
       out = relu(z @ W1m + b1) @ W2m + b2, k-tiled over the hidden dim."""
    z = z_ref[...]                                           # (TB, D) bf16

    def body(k, acc):
        kk = pl.multiple_of(k * k_chunk, LANE)
        h = jnp.dot(z, w1_ref[:, pl.ds(kk, k_chunk)],        # MXU, f32 acc
                    preferred_element_type=jnp.float32)
        h = jnp.maximum(h + b1_ref[:, pl.ds(kk, k_chunk)], 0.0)
        return acc + jnp.dot(h.astype(jnp.bfloat16),
                             w2_ref[pl.ds(kk, k_chunk), :],
                             preferred_element_type=jnp.float32)

    acc = lax.fori_loop(0, nk, body,
                        jnp.zeros(o_ref.shape, jnp.float32),
                        unroll=(nk <= 8))
    o_ref[...] = (acc + b2_ref[...]).astype(o_ref.dtype)


def conditioner_forward(z, w1m, b1, w2m, b2, out_features, *,
                        block_b=512, block_n=1024):
    """Batch- and feature-tiled Pallas call.

    z:   (B, D) float32
    w1m: (D, Hp)      masked + lane-padded weights, bfloat16
    b1:  (1, Hp)      float32
    w2m: (Hp, OUTp)   masked + lane-padded weights, bfloat16
    b2:  (1, OUTp)    float32
    Returns (B, out_features) float32 with out_features = D * trans_features.
    """
    B, D = z.shape
    Hp = w1m.shape[1]
    OUTp = w2m.shape[1]

    # Batch tile (sublane multiple of 8); pad B only up to a multiple of 8 and
    # let Pallas handle a ragged trailing batch tile.
    B8 = _round_up(B, 8)
    TB = min(_round_up(block_b, 8), B8)
    # Feature tile over OUT (bounds resident W2) and k-chunk over the hidden
    # dim (bounds the live (TB, KC) intermediate).
    TN = _pick_tile(OUTp, _round_up(block_n, LANE))
    KC = _pick_tile(Hp, 4 * LANE)

    # Shrink the batch tile if the per-step VMEM budget looks uncomfortable.
    while TB > 64 and _vmem_bytes(TB, D, Hp, TN, KC) > (20 << 20):
        TB = max(8, _round_up(TB // 2, 8))

    nN = OUTp // TN
    nB = pl.cdiv(B8, TB)
    nK = Hp // KC

    zb = z.astype(jnp.bfloat16)                  # stream z as bf16 (MXU-native)
    if B8 != B:
        zb = jnp.pad(zb, ((0, B8 - B), (0, 0)))

    resident = pl.Buffered(buffer_count=1)       # never re-DMA'd -> 1 buffer
    w2_mode = resident if nN == 1 else None      # default pipelining if streamed

    flops = 2 * B8 * (D * Hp * nN + Hp * OUTp)
    bytes_accessed = (B8 * D * 2 * nN + D * Hp * 2 + Hp * 4
                      + Hp * OUTp * 2 + OUTp * 4 + B8 * OUTp * 4)

    out = pl.pallas_call(
        partial(made_kernel, k_chunk=KC, nk=nK),
        out_shape=jax.ShapeDtypeStruct((B8, OUTp), jnp.float32),
        grid=(nN, nB),                           # N outer: W2 tile stays resident
        in_specs=[
            pl.BlockSpec((TB, D), lambda n, b: (b, 0)),                  # stream z
            pl.BlockSpec((D, Hp), lambda n, b: (0, 0),
                         pipeline_mode=resident),                        # W1
            pl.BlockSpec((1, Hp), lambda n, b: (0, 0),
                         pipeline_mode=resident),                        # b1
            pl.BlockSpec((Hp, TN), lambda n, b: (0, n),
                         pipeline_mode=w2_mode),                         # W2 tile
            pl.BlockSpec((1, TN), lambda n, b: (0, n),
                         pipeline_mode=w2_mode),                         # b2 tile
        ],
        out_specs=pl.BlockSpec((TB, TN), lambda n, b: (b, n)),
        compiler_params=pltpu.CompilerParams(
            dimension_semantics=("parallel", "parallel"),
            vmem_limit_bytes=min(64 << 20,
                                 max(32 << 20,
                                     2 * _vmem_bytes(TB, D, Hp, TN, KC)))),
        cost_estimate=pl.CostEstimate(flops=flops, transcendentals=0,
                                      bytes_accessed=bytes_accessed),
    )(zb, w1m, b1, w2m, b2)

    return out[:B, :out_features]


def make_params(variable_dim, trans_features, hidden, key):
    """Deterministic MADE-style masked parameters, lane-padded, weights in bf16.

    Degrees:
      input  variable i has degree i (1-indexed)
      hidden unit j     has degree in [1, max(D-1, 1)]
      output block i    has degree i; mask is strict (>) so h_i depends only on
                        z_{<i} (h_1 is a pure bias), matching
                        Conditioner.__control_net.
    Masked / padded entries are exactly 0 (exact in bf16), so padding and the
    dtype change contribute exactly 0 to the real outputs.
    """
    D, T, H = variable_dim, trans_features, hidden
    OUT = D * T
    Hp = _round_up(H, LANE)
    OUTp = _round_up(OUT, LANE)
    k1, k2, k3, k4 = jax.random.split(key, 4)

    deg_in = jnp.arange(1, D + 1)                             # (D,)
    deg_h = (jnp.arange(H) % max(D - 1, 1)) + 1               # (H,) in [1, D-1]
    deg_out = jnp.repeat(jnp.arange(1, D + 1), T)             # (OUT,)

    mask1 = (deg_h[None, :] >= deg_in[:, None]).astype(jnp.float32)   # (D, H)
    mask2 = (deg_out[None, :] > deg_h[:, None]).astype(jnp.float32)   # (H, OUT)

    w1 = 0.1 * jax.random.normal(k1, (D, H), jnp.float32) * mask1
    b1 = 0.1 * jax.random.normal(k2, (1, H), jnp.float32)
    w2 = 0.1 * jax.random.normal(k3, (H, OUT), jnp.float32) * mask2
    b2 = 0.1 * jax.random.normal(k4, (1, OUT), jnp.float32)

    w1 = jnp.pad(w1, ((0, 0), (0, Hp - H))).astype(jnp.bfloat16)
    b1 = jnp.pad(b1, ((0, 0), (0, Hp - H)))
    w2 = jnp.pad(w2, ((0, Hp - H), (0, OUTp - OUT))).astype(jnp.bfloat16)
    b2 = jnp.pad(b2, ((0, 0), (0, OUTp - OUT)))
    return w1, b1, w2, b2, OUT


def _reference(z, w1m, b1, w2m, b2, out_features):
    """Plain-JAX reference replicating the kernel's bf16 casts."""
    zb = z.astype(jnp.bfloat16).astype(jnp.float32)
    h = jnp.maximum(zb @ w1m.astype(jnp.float32) + b1, 0.0)
    h = h.astype(jnp.bfloat16).astype(jnp.float32)
    return (h @ w2m.astype(jnp.float32) + b2)[:, :out_features]


if __name__ == "__main__":
    key = jax.random.PRNGKey(0)
    kz, kp, kp2 = jax.random.split(key, 3)

    # ---- case 1: small conditioner (single-tile fast path) -----------------
    B, D, T, H = 2, 8, 4, 32
    z = jax.random.normal(kz, (B, D), jnp.float32)
    w1m, b1, w2m, b2, OUT = make_params(D, T, H, kp)

    h = jax.block_until_ready(conditioner_forward(z, w1m, b1, w2m, b2, OUT))
    assert h.shape == (B, OUT)
    h_ref = _reference(z, w1m, b1, w2m, b2, OUT)
    assert jnp.allclose(h, h_ref, atol=1e-3, rtol=1e-3)

    # Autoregressive property check (mirrors Conditioner.__control_net):
    # perturbing z[:, i] must leave h[:, :(i+1)*T] bit-identical.
    for i in range(D - 1):
        z_pert = z.at[:, i].add(1000.0)
        h_pert = jax.block_until_ready(
            conditioner_forward(z_pert, w1m, b1, w2m, b2, OUT))
        assert jnp.array_equal(h_pert[:, :(i + 1) * T], h[:, :(i + 1) * T])

    # ---- case 2: exercises ragged batch tiles, k-tiling and N-tiling -------
    B2, D2, T2, H2 = 20, 8, 20, 1024          # OUTp = 256, Hp = 1024
    z2 = jax.random.normal(jax.random.PRNGKey(1), (B2, D2), jnp.float32)
    w1m2, b12, w2m2, b22, OUT2 = make_params(D2, T2, H2, kp2)
    h2 = jax.block_until_ready(
        conditioner_forward(z2, w1m2, b12, w2m2, b22, OUT2,
                            block_b=8, block_n=128))
    assert h2.shape == (B2, OUT2)
    h2_ref = _reference(z2, w1m2, b12, w2m2, b22, OUT2)
    assert jnp.allclose(h2, h2_ref, atol=5e-3, rtol=5e-3)

    print("KERNEL_OK")
</pallas_src>

<mosaic_0001>
module attributes {stable_mosaic.version = 11 : i64} {
  func.func @made_kernel(%arg0: i32, %arg1: i32, %arg2: memref<8x8xbf16, #tpu.memory_space<vmem>>, %arg3: memref<8x128xbf16, #tpu.memory_space<vmem>>, %arg4: memref<1x128xf32, #tpu.memory_space<vmem>>, %arg5: memref<128x128xbf16, #tpu.memory_space<vmem>>, %arg6: memref<1x128xf32, #tpu.memory_space<vmem>>, %arg7: memref<8x128xf32, #tpu.memory_space<vmem>>) attributes {dimension_semantics = [#tpu.dimension_semantics<parallel>, #tpu.dimension_semantics<parallel>], iteration_bounds = array<i64: 1, 1>, scalar_prefetch = 0 : i64, scratch_operands = 0 : i64, tpu.core_type = #tpu.core_type<tc>, window_params = [{transform_indices = @transform_0, window_bounds = array<i64: 8, 8>}, {pipeline_mode = #tpu.pipeline_mode<synchronous>, transform_indices = @transform_1, window_bounds = array<i64: 8, 128>}, {pipeline_mode = #tpu.pipeline_mode<synchronous>, transform_indices = @transform_2, window_bounds = array<i64: 1, 128>}, {pipeline_mode = #tpu.pipeline_mode<synchronous>, transform_indices = @transform_3, window_bounds = array<i64: 128, 128>}, {pipeline_mode = #tpu.pipeline_mode<synchronous>, transform_indices = @transform_4, window_bounds = array<i64: 1, 128>}, {transform_indices = @transform_5, window_bounds = array<i64: 8, 128>}]} {
    %c0 = arith.constant 0 : index
    %c0_0 = arith.constant 0 : index
    %0 = vector.load %arg2[%c0, %c0_0] : memref<8x8xbf16, #tpu.memory_space<vmem>>, vector<8x8xbf16>
    %cst = arith.constant 0.000000e+00 : f32
    %1 = vector.broadcast %cst : f32 to vector<8x128xf32>
    %c0_i32 = arith.constant 0 : i32
    %c128_i32 = arith.constant 128 : i32
    %2 = arith.muli %c0_i32, %c128_i32 : i32
    %3 = tpu.assume_multiple %2, 128 : i32
    %c0_1 = arith.constant 0 : index
    %4 = arith.index_cast %3 : i32 to index
    %5 = vector.load %arg3[%c0_1, %4] : memref<8x128xbf16, #tpu.memory_space<vmem>>, vector<8x128xbf16>
    %cst_2 = arith.constant dense<0.000000e+00> : vector<8x128xf32>
    %6 = tpu.matmul %0, %5, %cst_2 {dimension_numbers = #tpu.dot_dimension_numbers<[1], [0], [0], [1], [0, 0, 1, 1], [], []>} : vector<8x8xbf16>, vector<8x128xbf16>, vector<8x128xf32> -> vector<8x128xf32>
    %c0_3 = arith.constant 0 : index
    %7 = arith.index_cast %3 : i32 to index
    %8 = vector.load %arg4[%c0_3, %7] : memref<1x128xf32, #tpu.memory_space<vmem>>, vector<1x128xf32>
    %9 = vector.broadcast %8 : vector<1x128xf32> to vector<8x128xf32>
    %10 = arith.addf %6, %9 : vector<8x128xf32>
    %cst_4 = arith.constant 0.000000e+00 : f32
    %11 = vector.broadcast %cst_4 : f32 to vector<8x128xf32>
    %12 = arith.maximumf %10, %11 : vector<8x128xf32>
    %13 = arith.truncf %12 : vector<8x128xf32> to vector<8x128xbf16>
    %14 = arith.index_cast %3 : i32 to index
    %c0_5 = arith.constant 0 : index
    %15 = vector.load %arg5[%14, %c0_5] : memref<128x128xbf16, #tpu.memory_space<vmem>>, vector<128x128xbf16>
    %cst_6 = arith.constant dense<0.000000e+00> : vector<8x128xf32>
    %16 = tpu.matmul %13, %15, %cst_6 {dimension_numbers = #tpu.dot_dimension_numbers<[1], [0], [0], [1], [0, 0, 1, 1], [], []>} : vector<8x128xbf16>, vector<128x128xbf16>, vector<8x128xf32> -> vector<8x128xf32>
    %17 = arith.addf %1, %16 : vector<8x128xf32>
    %c1_i32 = arith.constant 1 : i32
    %c0_7 = arith.constant 0 : index
    %c0_8 = arith.constant 0 : index
    %18 = vector.load %arg6[%c0_7, %c0_8] : memref<1x128xf32, #tpu.memory_space<vmem>>, vector<1x128xf32>
    %19 = vector.broadcast %18 : vector<1x128xf32> to vector<8x128xf32>
    %20 = arith.addf %17, %19 : vector<8x128xf32>
    %c0_9 = arith.constant 0 : index
    %c0_10 = arith.constant 0 : index
    %21 = vector.load %arg7[%c0_9, %c0_10] : memref<8x128xf32, #tpu.memory_space<vmem>>, vector<8x128xf32>
    tpu.vector_store %arg7[%c0_9, %c0_10], %20 {strides = array<i32>} : memref<8x128xf32, #tpu.memory_space<vmem>>, vector<8x128xf32>,
    return
  }
  func.func @transform_0(%arg0: i32, %arg1: i32) -> (i32, i32) {
    %c0_i32 = arith.constant 0 : i32
    %c0_i32_0 = arith.constant 0 : i32
    return %arg1, %c0_i32 : i32, i32
  }
  func.func @transform_1(%arg0: i32, %arg1: i32) -> (i32, i32) {
    %c0_i32 = arith.constant 0 : i32
    %c0_i32_0 = arith.constant 0 : i32
    %c0_i32_1 = arith.constant 0 : i32
    return %c0_i32, %c0_i32_0 : i32, i32
  }
  func.func @transform_2(%arg0: i32, %arg1: i32) -> (i32, i32) {
    %c0_i32 = arith.constant 0 : i32
    %c0_i32_0 = arith.constant 0 : i32
    %c0_i32_1 = arith.constant 0 : i32
    return %c0_i32, %c0_i32_0 : i32, i32
  }
  func.func @transform_3(%arg0: i32, %arg1: i32) -> (i32, i32) {
    %c0_i32 = arith.constant 0 : i32
    %c0_i32_0 = arith.constant 0 : i32
    return %c0_i32, %arg0 : i32, i32
  }
  func.func @transform_4(%arg0: i32, %arg1: i32) -> (i32, i32) {
    %c0_i32 = arith.constant 0 : i32
    %c0_i32_0 = arith.constant 0 : i32
    return %c0_i32, %arg0 : i32, i32
  }
  func.func @transform_5(%arg0: i32, %arg1: i32) -> (i32, i32) {
    %c0_i32 = arith.constant 0 : i32
    return %arg1, %arg0 : i32, i32
  }
}

</mosaic_0001>

<llo_original>
// kernel: tpu_custom_call.1
$region0: #{tpu_custom_call.1}
  #allocation0 [shape = 'u32[]', space=smem, size = 0x4, offset = 0x4, fixed_abs, tag = 'smem constant byte address 0x4 - core index']
  #allocation1 [shape = 'u32[144,128]{1,0:T(1,128)}', space=vmem, size = 0x12000, scoped, tag = 'internal scratch']
  %s0 = inlined_call_operand.hbm [shape: bf16[8,8], index: 0, kind: input, shape index: {}]
  %s1 = inlined_call_operand.hbm [shape: bf16[8,128], index: 1, kind: input, shape index: {}]
  %s2 = inlined_call_operand.vmem [shape: f32[1,128], index: 2, kind: input, shape index: {}]
  %s3 = inlined_call_operand.hbm [shape: bf16[128,128], index: 3, kind: input, shape index: {}]
  %s4 = inlined_call_operand.vmem [shape: f32[1,128], index: 4, kind: input, shape index: {}]
  %s5 = inlined_call_operand.hbm [shape: f32[8,128], index: 5, kind: output, shape index: {}]
  %s6 = sld [smem:[#allocation0]]
  $region42: #{tpu_custom_call.1} parent=0
    _
  %s8 = ssub.s32 1, %s6
  %s9 = scalar_select 0, %s8, %s6
  $region1: #{tpu_custom_call.1} parent=0
    #allocation2 [shape = 'u8[2048]{0}', space=vmem, size = 0x800, scoped, tag = 'input window, operand 0, single buffered']
    #allocation3 [shape = 's32[1]{0}', space=sflag, size = 0x4, scoped, tag = 'scoped memory for tpu_custom_call.1']
    #allocation4 [shape = 's32[1]{0}', space=sflag, size = 0x4, scoped, tag = 'scoped memory for tpu_custom_call.1']
    #allocation5 [shape = 'u8[2048]{0}', space=vmem, size = 0x800, scoped, tag = 'input window, operand 1, single buffered']
    #allocation6 [shape = 's32[1]{0}', space=sflag, size = 0x4, scoped, tag = 'scoped memory for tpu_custom_call.1']
    #allocation7 [shape = 'u8[32768]{0}', space=vmem, size = 0x8000, scoped, tag = 'input window, operand 3, single buffered']
    #allocation8 [shape = 'u8[4096]{0}', space=vmem, size = 0x1000, scoped, tag = 'output window, operand 0, single buffered']
    %10 = vsyncpa [#allocation3], 0
    %11 = vsyncpa [#allocation6], 0
    %12 = vsyncpa [#allocation4], 0
    // Predicated region
    $region2: #{tpu_custom_call.1} parent=1 // pred_check
      _
    $region3: #{tpu_custom_call.1} parent=1 // pred_check_branch
      %14 = sbr.rel (0) target = $region5
    $region4: #{tpu_custom_call.1} parent=1 // pred_region
      %s16 = ssub.s32 64, 64
      %17 = vsyncadd [#allocation3], %s16
      %s19 = sshll.u32 [#allocation2], 4
      %s20 = int_to_ptr.vmem [resolvable:$true] %s19
      %22 = dma.hbm_to_vmem [thread:$0]  %s0, 64, %s20, [#allocation3]
    $region5: #{tpu_custom_call.1} parent=1 // pred_fallthru
      _
    // Predicated region
    $region6: #{tpu_custom_call.1} parent=1 // pred_check
      _
    $region7: #{tpu_custom_call.1} parent=1 // pred_check_branch
      %24 = sbr.rel (0) target = $region9
    $region8: #{tpu_custom_call.1} parent=1 // pred_region
      %s26 = ssub.s32 64, 64
      %27 = vsyncadd [#allocation6], %s26
      %s29 = sshll.u32 [#allocation5], 4
      %s30 = int_to_ptr.vmem [resolvable:$true] %s29
      %32 = dma.hbm_to_vmem [thread:$0]  %s1, 64, %s30, [#allocation6]
    $region9: #{tpu_custom_call.1} parent=1 // pred_fallthru
      _
    // Predicated region
    $region10: #{tpu_custom_call.1} parent=1 // pred_check
      _
    $region11: #{tpu_custom_call.1} parent=1 // pred_check_branch
      %34 = sbr.rel (0) target = $region13
    $region12: #{tpu_custom_call.1} parent=1 // pred_region
      _
    $region13: #{tpu_custom_call.1} parent=1 // pred_fallthru
      _
    // Predicated region
    $region14: #{tpu_custom_call.1} parent=1 // pred_check
      _
    $region15: #{tpu_custom_call.1} parent=1 // pred_check_branch
      %36 = sbr.rel (0) target = $region17
    $region16: #{tpu_custom_call.1} parent=1 // pred_region
      %s38 = ssub.s32 1024, 1024
      %39 = vsyncadd [#allocation6], %s38
      %s40 = sshll.u32 [#allocation7], 4
      %s41 = int_to_ptr.vmem [resolvable:$true] %s40
      %46 = dma.hbm_to_vmem [thread:$0]  %s3, 1024, %s41, [#allocation6], 64, 64, 4
    $region17: #{tpu_custom_call.1} parent=1 // pred_fallthru
      _
    // Predicated region
    $region18: #{tpu_custom_call.1} parent=1 // pred_check
      _
    $region19: #{tpu_custom_call.1} parent=1 // pred_check_branch
      %48 = sbr.rel (0) target = $region21
    $region20: #{tpu_custom_call.1} parent=1 // pred_region
      _
    $region21: #{tpu_custom_call.1} parent=1 // pred_fallthru
      _
    // Predicated region
    $region22: #{tpu_custom_call.1} parent=1 // pred_check
      _
    $region23: #{tpu_custom_call.1} parent=1 // pred_check_branch
      %50 = sbr.rel (0) target = $region25
    $region24: #{tpu_custom_call.1} parent=1 // pred_region
      %51 = dma.done [#allocation3], 64
    $region25: #{tpu_custom_call.1} parent=1 // pred_fallthru
      _
    // Predicated region
    $region26: #{tpu_custom_call.1} parent=1 // pred_check
      _
    $region27: #{tpu_custom_call.1} parent=1 // pred_check_branch
      %53 = sbr.rel (0) target = $region29
    $region28: #{tpu_custom_call.1} parent=1 // pred_region
      %54 = dma.done [#allocation6], 64
    $region29: #{tpu_custom_call.1} parent=1 // pred_fallthru
      _
    // Predicated region
    $region30: #{tpu_custom_call.1} parent=1 // pred_check
      _
    $region31: #{tpu_custom_call.1} parent=1 // pred_check_branch
      %56 = sbr.rel (0) target = $region33
    $region32: #{tpu_custom_call.1} parent=1 // pred_region
      %57 = dma.done [#allocation6], 1024
    $region33: #{tpu_custom_call.1} parent=1 // pred_fallthru
      _
    %v59 = vld [vmem:[#allocation2] sm:$0xf]
    %v60 = vld [vmem:[#allocation5] sm:$0xf]
    %v61 = vld [vmem:[%s2] sm:$0x1]
    %v63 = vlaneseq
    %v64 = vshrl.u32 %v63, 7
    %v65 = vsub.s32 0, %v64
    %v66 = vrot.slane %v61, %v65
    %vm68 = vcmask 64512
    %v70 = vsel %vm68, %v59, 0
    %vm72 = vcmask 1043456
    %v74 = vsel %vm72, %v60, 0
    %76 = vmatprep.subr.bf16.mxu0 0
    %77 = vmatpush1.bf16.msra.mxu0 %v74
    %78 = vmatprep.subr.bf16.mxu0 0
    %79 = vmatpush1.bf16.msra.mxu0 0
    %80 = vmatprep.subr.bf16.mxu0 0
    %81 = vmatpush1.bf16.msra.mxu0 0
    %82 = vmatprep.subr.bf16.mxu0 0
    %83 = vmatpush1.bf16.msra.mxu0 0
    %84 = vmatprep.subr.bf16.mxu0 0
    %85 = vmatpush1.bf16.msra.mxu0 0
    %86 = vmatprep.subr.bf16.mxu0 0
    %87 = vmatpush1.bf16.msra.mxu0 0
    %88 = vmatprep.subr.bf16.mxu0 0
    %89 = vmatpush1.bf16.msra.mxu0 0
    %90 = vmatprep.subr.bf16.mxu0 0
    %91 = vmatpush1.bf16.msra.mxu0 0
    %92 = vmatprep.subr.bf16.mxu0 0
    %93 = vmatpush1.bf16.msra.mxu0 0
    %94 = vmatprep.subr.bf16.mxu0 0
    %95 = vmatpush1.bf16.msra.mxu0 0
    %96 = vmatprep.subr.bf16.mxu0 0
    %97 = vmatpush1.bf16.msra.mxu0 0
    %98 = vmatprep.subr.bf16.mxu0 0
    %99 = vmatpush1.bf16.msra.mxu0 0
    %100 = vmatprep.subr.bf16.mxu0 0
    %101 = vmatpush1.bf16.msra.mxu0 0
    %102 = vmatprep.subr.bf16.mxu0 0
    %103 = vmatpush1.bf16.msra.mxu0 0
    %104 = vmatprep.subr.bf16.mxu0 0
    %105 = vmatpush1.bf16.msra.mxu0 0
    %106 = vmatprep.subr.bf16.mxu0 0
    %107 = vmatpush1.bf16.msra.mxu0 0
    %108 = vmatprep.mubr.bf16.mxu0 0
    %109 = vmatmul.mubr.bf16.gmra.mrb[0].mxu0 %v70
    %v110 = vpop.f32.mrb[0].mxu0
    %v111 = vadd.f32 %v66, %v110
    %v112 = vpop.f32.mrb[0].mxu0
    %v113 = vpop.f32.mrb[0].mxu0
    %v114 = vpop.f32.mrb[0].mxu0
    %115 = vdwg.mxu0
    %v116 = vmax.f32 %v111, 0.0
    %v117 = vpack.c.bf16 %v116, %v116
    %v118 = vld [vmem:[#allocation7] sm:$0xf]
    %v119 = vld [vmem:[#allocation7 + $0x4] sm:$0xf]
    %v120 = vld [vmem:[#allocation7 + $0x8] sm:$0xf]
    %v121 = vld [vmem:[#allocation7 + $0xc] sm:$0xf]
    %v122 = vld [vmem:[#allocation7 + $0x10] sm:$0xf]
    %v123 = vld [vmem:[#allocation7 + $0x14] sm:$0xf]
    %v124 = vld [vmem:[#allocation7 + $0x18] sm:$0xf]
    %v125 = vld [vmem:[#allocation7 + $0x1c] sm:$0xf]
    %v126 = vld [vmem:[#allocation7 + $0x20] sm:$0xf]
    %v127 = vld [vmem:[#allocation7 + $0x24] sm:$0xf]
    %v128 = vld [vmem:[#allocation7 + $0x28] sm:$0xf]
    %v129 = vld [vmem:[#allocation7 + $0x2c] sm:$0xf]
    %v130 = vld [vmem:[#allocation7 + $0x30] sm:$0xf]
    %v131 = vld [vmem:[#allocation7 + $0x34] sm:$0xf]
    %v132 = vld [vmem:[#allocation7 + $0x38] sm:$0xf]
    %v133 = vld [vmem:[#allocation7 + $0x3c] sm:$0xf]
    %v134 = vld [vmem:[%s4] sm:$0x1]
    %v136 = vlaneseq
    %v137 = vshrl.u32 %v136, 7
    %v138 = vsub.s32 0, %v137
    %v139 = vrot.slane %v134, %v138
    %v157 = vunpack.c.l.b16 %v118
    %v158 = vunpack.c.l.b16 %v119
    %v159 = vunpack.c.l.b16 %v120
    %v160 = vunpack.c.l.b16 %v121
    %v161 = vunpack.c.l.b16 %v122
    %v162 = vunpack.c.l.b16 %v123
    %v163 = vunpack.c.l.b16 %v124
    %v164 = vunpack.c.l.b16 %v125
    %v165 = vunpack.c.l.b16 %v126
    %v166 = vunpack.c.l.b16 %v127
    %v167 = vunpack.c.l.b16 %v128
    %v168 = vunpack.c.l.b16 %v129
    %v169 = vunpack.c.l.b16 %v130
    %v170 = vunpack.c.l.b16 %v131
    %v171 = vunpack.c.l.b16 %v132
    %v172 = vunpack.c.l.b16 %v133
    %v173 = vpack.c.b16 %v158, %v157
    %v174 = vpack.c.b16 %v160, %v159
    %v175 = vpack.c.b16 %v162, %v161
    %v176 = vpack.c.b16 %v164, %v163
    %v177 = vpack.c.b16 %v166, %v165
    %v178 = vpack.c.b16 %v168, %v167
    %v179 = vpack.c.b16 %v170, %v169
    %v180 = vpack.c.b16 %v172, %v171
    %189 = vmatprep.subr.bf16.mxu0 0
    %190 = vmatpush1.bf16.msra.mxu0 %v173
    %191 = vmatprep.subr.bf16.mxu0 0
    %192 = vmatpush1.bf16.msra.mxu0 %v174
    %193 = vmatprep.subr.bf16.mxu0 0
    %194 = vmatpush1.bf16.msra.mxu0 %v175
    %195 = vmatprep.subr.bf16.mxu0 0
    %196 = vmatpush1.bf16.msra.mxu0 %v176
    %197 = vmatprep.subr.bf16.mxu0 0
    %198 = vmatpush1.bf16.msra.mxu0 %v177
    %199 = vmatprep.subr.bf16.mxu0 0
    %200 = vmatpush1.bf16.msra.mxu0 %v178
    %201 = vmatprep.subr.bf16.mxu0 0
    %202 = vmatpush1.bf16.msra.mxu0 %v179
    %203 = vmatprep.subr.bf16.mxu0 0
    %204 = vmatpush1.bf16.msra.mxu0 %v180
    %205 = vmatprep.subr.bf16.mxu0 0
    %206 = vmatpush1.bf16.msra.mxu0 0
    %207 = vmatprep.subr.bf16.mxu0 0
    %208 = vmatpush1.bf16.msra.mxu0 0
    %209 = vmatprep.subr.bf16.mxu0 0
    %210 = vmatpush1.bf16.msra.mxu0 0
    %211 = vmatprep.subr.bf16.mxu0 0
    %212 = vmatpush1.bf16.msra.mxu0 0
    %213 = vmatprep.subr.bf16.mxu0 0
    %214 = vmatpush1.bf16.msra.mxu0 0
    %215 = vmatprep.subr.bf16.mxu0 0
    %216 = vmatpush1.bf16.msra.mxu0 0
    %217 = vmatprep.subr.bf16.mxu0 0
    %218 = vmatpush1.bf16.msra.mxu0 0
    %219 = vmatprep.subr.bf16.mxu0 0
    %220 = vmatpush1.bf16.msra.mxu0 0
    %221 = vmatprep.mubr.bf16.mxu0 0
    %222 = vmatmul.mubr.bf16.gmra.mrb[0].mxu0 %v117
    %v223 = vpop.f32.mrb[0].mxu0
    %v224 = vadd.f32 %v139, %v223
    %v225 = vpop.f32.mrb[0].mxu0
    %v226 = vpop.f32.mrb[0].mxu0
    %v227 = vpop.f32.mrb[0].mxu0
    %228 = vdwg.mxu0
    %229 = vst [vmem:[#allocation8] sm:$0xff] %v224
    // Predicated region
    $region34: #{tpu_custom_call.1} parent=1 // pred_check
      _
    $region35: #{tpu_custom_call.1} parent=1 // pred_check_branch
      %231 = sbr.rel (0) target = $region37
    $region36: #{tpu_custom_call.1} parent=1 // pred_region
      %s233 = ssub.s32 128, 128
      %234 = vsyncadd [#allocation4], %s233
      %s236 = sshll.u32 [#allocation8], 4
      %s237 = int_to_ptr.vmem [resolvable:$true] %s236
      %239 = dma.vmem_to_hbm [thread:$0]  %s237, 128, %s5, [#allocation4]
    $region37: #{tpu_custom_call.1} parent=1 // pred_fallthru
      _
    // Predicated region
    $region38: #{tpu_custom_call.1} parent=1 // pred_check
      _
    $region39: #{tpu_custom_call.1} parent=1 // pred_check_branch
      %241 = sbr.rel (0) target = $region41
    $region40: #{tpu_custom_call.1} parent=1 // pred_region
      %242 = dma.done [#allocation4], 128
    $region41: #{tpu_custom_call.1} parent=1 // pred_fallthru
      _
    %243 = vsyncpa [#allocation3], 1
    %244 = vsyncpa [#allocation6], 1
    %245 = vsyncpa [#allocation4], 1

</llo_original>
